<compile_context>
chip_gen: v6e
topology: v6e:2x2x1
jax: 0.10.0
libtpu: 0.0.40
codegen_flags: <defaults>
</compile_context>

<pallas_src>
import functools

import jax
import jax.numpy as jnp
from jax.experimental import pallas as pl
from jax.experimental.pallas import tpu as pltpu

_LANE = 128


def _policy_loss_kernel(prob_ref, mask_ref, out_ref, acc_ref, *,
                        m_rows, block_rows, blocks_per_split, needs_row_mask):
    """Grid = (split, row-block). Each split accumulates an (8, N) partial.

    prob_ref : VMEM (BM, N) f32      row-block of selected_edge_prob
    mask_ref : VMEM (BM, N) narrow   row-block of mask (int8 / bf16 / f32)
    out_ref  : VMEM (8, N)  f32      this split's per-lane partial sums
    acc_ref  : VMEM (8, N)  f32      running accumulator (scratch)
    """
    s = pl.program_id(0)      # split (parallel across TensorCores on v7x)
    k = pl.program_id(1)      # row-block within the split (reduction axis)

    @pl.when(k == 0)
    def _():
        acc_ref[...] = jnp.zeros_like(acc_ref)

    # Hot path: narrow->f32 cast + multiply are VPU work hidden under DMA.
    prod = prob_ref[...] * mask_ref[...].astype(jnp.float32)

    if needs_row_mask:
        # Zero rows past the true row count (tail block, or phantom block of
        # an uneven split whose index_map was clamped).  The padded region's
        # contents are unspecified, so this mask is mandatory, not optional.
        valid = m_rows - (s * blocks_per_split + k) * block_rows
        row_ids = jax.lax.broadcasted_iota(jnp.int32, (block_rows, 1), 0)
        prod = jnp.where(row_ids < valid, prod, 0.0)

    n_cols = prod.shape[-1]
    if block_rows % 8 == 0:
        # Layout-preserving sublane-group fold: per-step work is pure VPU
        # vreg adds; the single cross-sublane/lane reduce lives in the wrapper.
        acc_ref[...] += prod.reshape(block_rows // 8, 8, n_cols).sum(axis=0)
    else:
        acc_ref[0:1, :] += jnp.sum(prod, axis=0, keepdims=True)

    @pl.when(k == pl.num_programs(1) - 1)
    def _():
        out_ref[...] = acc_ref[...]


def _vmem_capacity_bytes():
    try:
        return int(pltpu.get_tpu_info().vmem_capacity_bytes)
    except Exception:
        return 64 * 1024 * 1024          # conservative (v7x per-core VMEM)


def _prep_mask(mask):
    """Keep the mask in a narrow kernel-friendly dtype (cast happens in-kernel)."""
    msk = jnp.asarray(mask)
    if msk.dtype == jnp.bool_:
        return msk.astype(jnp.int8)
    if msk.dtype.name in ("int8", "uint8", "bfloat16", "float32"):
        return msk
    return msk.astype(jnp.float32)


def _lane_densify(prob, msk):
    """Contiguous reshape (no copy) to a lane-dense (R, C) view when N%128 != 0."""
    m, n = prob.shape
    if n % _LANE == 0:
        return prob, msk
    total = m * n
    for c in (1024, 512, 256, _LANE):
        if total % c == 0:
            return prob.reshape(total // c, c), msk.reshape(total // c, c)
    return prob, msk                      # fall back: full-width unaligned blocks


def _choose_block_rows(m_rows, n_cols, max_tile_bytes):
    budget_rows = max_tile_bytes // (n_cols * 4)
    if m_rows <= budget_rows:
        return m_rows                     # single block == full dims: always legal
    rows = max(32, (budget_rows // 32) * 32)   # x32: int8/bool tile friendly
    return m_rows if rows >= m_rows else rows


def policy_loss(selected_edge_prob, reward, mask, *, max_tile_bytes=None):
    """JAX wrapper mirroring policy_loss.forward; returns (1,) float32."""
    prob = jnp.asarray(selected_edge_prob, jnp.float32)
    msk = _prep_mask(mask)
    assert prob.shape == msk.shape and prob.ndim == 2
    prob, msk = _lane_densify(prob, msk)
    m_rows, n_cols = prob.shape

    phys_vmem = _vmem_capacity_bytes()
    if max_tile_bytes is None:
        # ~6-8 MiB per f32 prob tile, scaled to this generation's VMEM.
        max_tile_bytes = min(8 * 1024 * 1024, phys_vmem // 10)

    block_rows = _choose_block_rows(m_rows, n_cols, max_tile_bytes)
    num_blocks = int(pl.cdiv(m_rows, block_rows))
    num_splits = 2 if num_blocks >= 2 else 1       # one split per v7x TensorCore
    blocks_per_split = int(pl.cdiv(num_blocks, num_splits))
    covered_rows = num_splits * blocks_per_split * block_rows
    needs_row_mask = covered_rows != m_rows

    if num_splits * blocks_per_split != num_blocks:
        # Uneven split: clamp the phantom block in-bounds; the in-kernel row
        # mask zeroes its duplicated contribution.
        def in_map(s, k):
            return (jnp.minimum(s * blocks_per_split + k, num_blocks - 1), 0)
    else:
        def in_map(s, k):
            return (s * blocks_per_split + k, 0)

    kernel = functools.partial(
        _policy_loss_kernel,
        m_rows=m_rows, block_rows=block_rows,
        blocks_per_split=blocks_per_split, needs_row_mask=needs_row_mask)

    # VMEM working set: 2 pipeline buffers per input + accumulator + outputs.
    prob_tile = block_rows * n_cols * 4
    mask_tile = block_rows * n_cols * msk.dtype.itemsize
    out_bytes = num_splits * 8 * n_cols * 4
    working = 2 * (prob_tile + mask_tile) + 8 * n_cols * 4 + 2 * out_bytes
    vmem_limit = int(min(max(2 * working, 32 * 1024 * 1024), (phys_vmem * 3) // 4))
    vmem_limit = max(vmem_limit, working + 2 * 1024 * 1024)

    grid_spec = pltpu.PrefetchScalarGridSpec(
        num_scalar_prefetch=0,
        grid=(num_splits, blocks_per_split),
        in_specs=[
            pl.BlockSpec((block_rows, n_cols), in_map),   # prob tile (f32)
            pl.BlockSpec((block_rows, n_cols), in_map),   # mask tile (narrow)
        ],
        out_specs=pl.BlockSpec((8, n_cols), lambda s, k: (s, 0)),
        scratch_shapes=[pltpu.VMEM((8, n_cols), jnp.float32)],
    )

    partials = pl.pallas_call(
        kernel,
        out_shape=jax.ShapeDtypeStruct((num_splits * 8, n_cols), jnp.float32),
        grid_spec=grid_spec,
        compiler_params=pltpu.CompilerParams(
            dimension_semantics=("parallel", "arbitrary"),
            vmem_limit_bytes=vmem_limit,
        ),
    )(prob, msk)

    # Tiny scalar epilogue in the wrapper (drops the SMEM reward input and the
    # in-kernel cross-lane reduce).
    reward_arr = jnp.asarray(reward, jnp.float32)
    total = jnp.sum(partials)
    return (jnp.log(total + 1e-6) * (-reward_arr)).reshape((1,))


def _reference(prob, reward, mask):
    p = jnp.asarray(prob, jnp.float32)
    m = jnp.asarray(mask, jnp.float32)
    r = jnp.asarray(reward, jnp.float32)
    return (jnp.log(jnp.sum(p * m) + 1e-6) * (-r)).reshape((1,))


if __name__ == "__main__":
    key = jax.random.PRNGKey(0)

    def make(m, n, seed, mask_dtype):
        kp, km = jax.random.split(jax.random.fold_in(key, seed))
        prob = jax.random.uniform(kp, (m, n), dtype=jnp.float32)
        mask = jax.random.uniform(km, (m, n)) > 0.5
        return prob, (mask if mask_dtype == jnp.bool_ else mask.astype(mask_dtype))

    def check(out, prob, reward, mask):
        ref = _reference(prob, reward, mask)
        assert out.shape == (1,) and out.dtype == jnp.float32
        assert jnp.allclose(out, ref, rtol=1e-4, atol=1e-5), (out, ref)

    # 1) Aligned shape, int8 mask, single large tile (grid (1,1)).
    prob1, mask1 = make(256, 128, 1, jnp.int8)
    out1 = jax.block_until_ready(policy_loss(prob1, 1.5, mask1))
    check(out1, prob1, 1.5, mask1)

    # 2) Ragged M, int8 mask, forced small tiles -> 3 real blocks + 1 phantom:
    #    exercises int8 row tiles, multi-step accumulation, clamped index_map
    #    and in-kernel tail masking (grid (2,2)).
    prob2, mask2 = make(150, 256, 2, jnp.int8)
    out2 = jax.block_until_ready(
        policy_loss(prob2, 0.75, mask2, max_tile_bytes=64 * 256 * 4))
    check(out2, prob2, 0.75, mask2)

    # 3) Ragged M, float32 mask, forced tiles -> 2 parallel splits of 1 block.
    prob3, mask3 = make(50, 128, 3, jnp.float32)
    out3 = jax.block_until_ready(
        policy_loss(prob3, -0.3, mask3, max_tile_bytes=32 * 128 * 4))
    check(out3, prob3, -0.3, mask3)

    # 4) Same data, default budget -> single full-dim block with 50 rows.
    out4 = jax.block_until_ready(policy_loss(prob3, -0.3, mask3))
    check(out4, prob3, -0.3, mask3)

    # 5) N % 128 != 0 with a bool mask -> lane-densified to (4, 1024).
    prob5, mask5 = make(64, 64, 5, jnp.bool_)
    out5 = jax.block_until_ready(policy_loss(prob5, 2.0, mask5))
    check(out5, prob5, 2.0, mask5)

    print("KERNEL_OK")
</pallas_src>

<mosaic_0001>
module attributes {stable_mosaic.version = 11 : i64} {
  func.func @_policy_loss_kernel(%arg0: i32, %arg1: i32, %arg2: memref<256x128xf32, #tpu.memory_space<vmem>>, %arg3: memref<256x128xi8, #tpu.memory_space<vmem>>, %arg4: memref<8x128xf32, #tpu.memory_space<vmem>>, %arg5: memref<8x128xf32, #tpu.memory_space<vmem>>) attributes {dimension_semantics = [#tpu.dimension_semantics<parallel>, #tpu.dimension_semantics<arbitrary>], iteration_bounds = array<i64: 1, 1>, scalar_prefetch = 0 : i64, scratch_operands = 1 : i64, tpu.core_type = #tpu.core_type<tc>, window_params = [{transform_indices = @transform_0, window_bounds = array<i64: 256, 128>}, {transform_indices = @transform_1, window_bounds = array<i64: 256, 128>}, {transform_indices = @transform_2, window_bounds = array<i64: 8, 128>}]} {
    %c0_i32 = arith.constant 0 : i32
    %0 = arith.cmpi eq, %arg1, %c0_i32 : i32
    %1 = arith.extui %0 : i1 to i32
    %c0_i32_0 = arith.constant 0 : i32
    %2 = arith.cmpi ne, %1, %c0_i32_0 : i32
    scf.if %2 {
      %cst_10 = arith.constant 0.000000e+00 : f32
      %15 = vector.broadcast %cst_10 : f32 to vector<8x128xf32>
      %c0_11 = arith.constant 0 : index
      %c0_12 = arith.constant 0 : index
      %16 = vector.load %arg5[%c0_11, %c0_12] : memref<8x128xf32, #tpu.memory_space<vmem>>, vector<8x128xf32>
      tpu.vector_store %arg5[%c0_11, %c0_12], %15 {strides = array<i32>} : memref<8x128xf32, #tpu.memory_space<vmem>>, vector<8x128xf32>,
    } else {
    }
    %c0 = arith.constant 0 : index
    %c0_1 = arith.constant 0 : index
    %3 = vector.load %arg2[%c0, %c0_1] : memref<256x128xf32, #tpu.memory_space<vmem>>, vector<256x128xf32>
    %c0_2 = arith.constant 0 : index
    %c0_3 = arith.constant 0 : index
    %4 = vector.load %arg3[%c0_2, %c0_3] : memref<256x128xi8, #tpu.memory_space<vmem>>, vector<256x128xi8>
    %5 = arith.sitofp %4 : vector<256x128xi8> to vector<256x128xf32>
    %6 = arith.mulf %3, %5 : vector<256x128xf32>
    %c0_4 = arith.constant 0 : index
    %c0_5 = arith.constant 0 : index
    %7 = vector.load %arg5[%c0_4, %c0_5] : memref<8x128xf32, #tpu.memory_space<vmem>>, vector<8x128xf32>
    %8 = vector.shape_cast %6 : vector<256x128xf32> to vector<32x8x128xf32>
    %cst = arith.constant dense<0.000000e+00> : vector<8x128xf32>
    %9 = vector.multi_reduction <add>, %8, %cst [0] : vector<32x8x128xf32> to vector<8x128xf32>
    %10 = arith.addf %7, %9 : vector<8x128xf32>
    %c0_6 = arith.constant 0 : index
    %c0_7 = arith.constant 0 : index
    %11 = vector.load %arg5[%c0_6, %c0_7] : memref<8x128xf32, #tpu.memory_space<vmem>>, vector<8x128xf32>
    tpu.vector_store %arg5[%c0_6, %c0_7], %10 {strides = array<i32>} : memref<8x128xf32, #tpu.memory_space<vmem>>, vector<8x128xf32>,
    %c0_i32_8 = arith.constant 0 : i32
    %12 = arith.cmpi eq, %arg1, %c0_i32_8 : i32
    %13 = arith.extui %12 : i1 to i32
    %c0_i32_9 = arith.constant 0 : i32
    %14 = arith.cmpi ne, %13, %c0_i32_9 : i32
    scf.if %14 {
      %c0_10 = arith.constant 0 : index
      %c0_11 = arith.constant 0 : index
      %15 = vector.load %arg5[%c0_10, %c0_11] : memref<8x128xf32, #tpu.memory_space<vmem>>, vector<8x128xf32>
      %c0_12 = arith.constant 0 : index
      %c0_13 = arith.constant 0 : index
      %16 = vector.load %arg4[%c0_12, %c0_13] : memref<8x128xf32, #tpu.memory_space<vmem>>, vector<8x128xf32>
      tpu.vector_store %arg4[%c0_12, %c0_13], %15 {strides = array<i32>} : memref<8x128xf32, #tpu.memory_space<vmem>>, vector<8x128xf32>,
    } else {
    }
    return
  }
  func.func @transform_0(%arg0: i32, %arg1: i32) -> (i32, i32) {
    %c1_i32 = arith.constant 1 : i32
    %0 = arith.muli %arg0, %c1_i32 : i32
    %1 = arith.addi %0, %arg1 : i32
    %c0_i32 = arith.constant 0 : i32
    %c0_i32_0 = arith.constant 0 : i32
    return %1, %c0_i32 : i32, i32
  }
  func.func @transform_1(%arg0: i32, %arg1: i32) -> (i32, i32) {
    %c1_i32 = arith.constant 1 : i32
    %0 = arith.muli %arg0, %c1_i32 : i32
    %1 = arith.addi %0, %arg1 : i32
    %c0_i32 = arith.constant 0 : i32
    %c0_i32_0 = arith.constant 0 : i32
    return %1, %c0_i32 : i32, i32
  }
  func.func @transform_2(%arg0: i32, %arg1: i32) -> (i32, i32) {
    %c0_i32 = arith.constant 0 : i32
    %c0_i32_0 = arith.constant 0 : i32
    return %arg0, %c0_i32 : i32, i32
  }
}

</mosaic_0001>

<llo_original>
// kernel: tpu_custom_call.1
$region0: #{tpu_custom_call.1}
  #allocation0 [shape = 'u32[]', space=smem, size = 0x4, offset = 0x4, fixed_abs, tag = 'smem constant byte address 0x4 - core index']
  #allocation1 [shape = 'u32[144,128]{1,0:T(1,128)}', space=vmem, size = 0x12000, scoped, tag = 'internal scratch']
  #allocation2 [shape = 'f32[8,128]{1,0:T(8,128)}', space=vmem, size = 0x1000, scoped, tag = 'scratch operand']
  %s0 = inlined_call_operand.hbm [shape: f32[256,128], index: 0, kind: input, shape index: {}]
  %s1 = inlined_call_operand.hbm [shape: s8[256,128], index: 1, kind: input, shape index: {}]
  %s2 = inlined_call_operand.hbm [shape: f32[8,128], index: 2, kind: output, shape index: {}]
  %s3 = sld [smem:[#allocation0]]
  $region34: #{tpu_custom_call.1} parent=0
    _
  %s5 = ssub.s32 1, %s3
  %s6 = scalar_select 0, %s5, %s3
  $region1: #{tpu_custom_call.1} parent=0
    #allocation3 [shape = 'u8[131072]{0}', space=vmem, size = 0x20000, scoped, tag = 'input window, operand 0, single buffered']
    #allocation4 [shape = 's32[1]{0}', space=sflag, size = 0x4, scoped, tag = 'scoped memory for tpu_custom_call.1']
    #allocation5 [shape = 's32[1]{0}', space=sflag, size = 0x4, scoped, tag = 'scoped memory for tpu_custom_call.1']
    #allocation6 [shape = 'u8[32768]{0}', space=vmem, size = 0x8000, scoped, tag = 'input window, operand 1, single buffered']
    #allocation7 [shape = 's32[1]{0}', space=sflag, size = 0x4, scoped, tag = 'scoped memory for tpu_custom_call.1']
    #allocation8 [shape = 'u8[4096]{0}', space=vmem, size = 0x1000, scoped, tag = 'output window, operand 0, single buffered']
    %7 = vsyncpa [#allocation4], 0
    %8 = vsyncpa [#allocation7], 0
    %9 = vsyncpa [#allocation5], 0
    // Predicated region
    $region2: #{tpu_custom_call.1} parent=1 // pred_check
      _
    $region3: #{tpu_custom_call.1} parent=1 // pred_check_branch
      %11 = sbr.rel (0) target = $region5
    $region4: #{tpu_custom_call.1} parent=1 // pred_region
      %s12 = sadd.s32 0, 0
      %s13 = smul.u32 32, %s12
      %s15 = ssub.s32 4096, 4096
      %16 = vsyncadd [#allocation4], %s15
      %s17 = smul.addr %s13, 128
      %s18 = scalar_lea.hbm %s0, %s17
      %s19 = sshll.u32 [#allocation3], 4
      %s20 = int_to_ptr.vmem [resolvable:$true] %s19
      %25 = dma.hbm_to_vmem [thread:$0]  %s18, 4096, %s20, [#allocation4], 128, 128, 8
    $region5: #{tpu_custom_call.1} parent=1 // pred_fallthru
      _
    // Predicated region
    $region6: #{tpu_custom_call.1} parent=1 // pred_check
      _
    $region7: #{tpu_custom_call.1} parent=1 // pred_check_branch
      %27 = sbr.rel (0) target = $region9
    $region8: #{tpu_custom_call.1} parent=1 // pred_region
      %s28 = sadd.s32 0, 0
      %s29 = smul.u32 8, %s28
      %s31 = ssub.s32 1024, 1024
      %32 = vsyncadd [#allocation7], %s31
      %s33 = smul.addr %s29, 128
      %s34 = scalar_lea.hbm %s1, %s33
      %s35 = sshll.u32 [#allocation6], 4
      %s36 = int_to_ptr.vmem [resolvable:$true] %s35
      %41 = dma.hbm_to_vmem [thread:$0]  %s34, 1024, %s36, [#allocation7], 128, 128, 8
    $region9: #{tpu_custom_call.1} parent=1 // pred_fallthru
      _
    // Predicated region
    $region10: #{tpu_custom_call.1} parent=1 // pred_check
      _
    $region11: #{tpu_custom_call.1} parent=1 // pred_check_branch
      %43 = sbr.rel (0) target = $region13
    $region12: #{tpu_custom_call.1} parent=1 // pred_region
      %44 = dma.done [#allocation4], 4096
    $region13: #{tpu_custom_call.1} parent=1 // pred_fallthru
      _
    // Predicated region
    $region14: #{tpu_custom_call.1} parent=1 // pred_check
      _
    $region15: #{tpu_custom_call.1} parent=1 // pred_check_branch
      %46 = sbr.rel (0) target = $region17
    $region16: #{tpu_custom_call.1} parent=1 // pred_region
      %47 = dma.done [#allocation7], 1024
    $region17: #{tpu_custom_call.1} parent=1 // pred_fallthru
      _
    %s48 = sadd.s32 0, 0
    %s49 = smul.u32 32, %s48
    %s50 = sadd.s32 0, 0
    %s51 = smul.u32 8, %s50
    %p52 = scmp.eq.s32.totalorder 0, 0
    // Predicated region
    $region18: #{tpu_custom_call.1} parent=1 // pred_check
      %p53 = pneg %p52
    $region19: #{tpu_custom_call.1} parent=1 // pred_check_branch
      %55 = sbr.rel (%p53) target = $region21
    $region20: #{tpu_custom_call.1} parent=1 // pred_region
      %56 = vst [vmem:[#allocation2] sm:$0xff] 0.0
    $region21: #{tpu_custom_call.1} parent=1 // pred_fallthru
      _
    %v57 = vld [vmem:[#allocation3] sm:$0xff]
    %v58 = vld [vmem:[#allocation3 + $0x8] sm:$0xff]
    %v59 = vld [vmem:[#allocation3 + $0x10] sm:$0xff]
    %v60 = vld [vmem:[#allocation3 + $0x18] sm:$0xff]
    %v61 = vld [vmem:[#allocation3 + $0x20] sm:$0xff]
    %v62 = vld [vmem:[#allocation3 + $0x28] sm:$0xff]
    %v63 = vld [vmem:[#allocation3 + $0x30] sm:$0xff]
    %v64 = vld [vmem:[#allocation3 + $0x38] sm:$0xff]
    %v65 = vld [vmem:[#allocation3 + $0x40] sm:$0xff]
    %v66 = vld [vmem:[#allocation3 + $0x48] sm:$0xff]
    %v67 = vld [vmem:[#allocation3 + $0x50] sm:$0xff]
    %v68 = vld [vmem:[#allocation3 + $0x58] sm:$0xff]
    %v69 = vld [vmem:[#allocation3 + $0x60] sm:$0xff]
    %v70 = vld [vmem:[#allocation3 + $0x68] sm:$0xff]
    %v71 = vld [vmem:[#allocation3 + $0x70] sm:$0xff]
    %v72 = vld [vmem:[#allocation3 + $0x78] sm:$0xff]
    %v73 = vld [vmem:[#allocation3 + $0x80] sm:$0xff]
    %v74 = vld [vmem:[#allocation3 + $0x88] sm:$0xff]
    %v75 = vld [vmem:[#allocation3 + $0x90] sm:$0xff]
    %v76 = vld [vmem:[#allocation3 + $0x98] sm:$0xff]
    %v77 = vld [vmem:[#allocation3 + $0xa0] sm:$0xff]
    %v78 = vld [vmem:[#allocation3 + $0xa8] sm:$0xff]
    %v79 = vld [vmem:[#allocation3 + $0xb0] sm:$0xff]
    %v80 = vld [vmem:[#allocation3 + $0xb8] sm:$0xff]
    %v81 = vld [vmem:[#allocation3 + $0xc0] sm:$0xff]
    %v82 = vld [vmem:[#allocation3 + $0xc8] sm:$0xff]
    %v83 = vld [vmem:[#allocation3 + $0xd0] sm:$0xff]
    %v84 = vld [vmem:[#allocation3 + $0xd8] sm:$0xff]
    %v85 = vld [vmem:[#allocation3 + $0xe0] sm:$0xff]
    %v86 = vld [vmem:[#allocation3 + $0xe8] sm:$0xff]
    %v87 = vld [vmem:[#allocation3 + $0xf0] sm:$0xff]
    %v88 = vld [vmem:[#allocation3 + $0xf8] sm:$0xff]
    %v89 = vld [vmem:[#allocation6] sm:$0xff]
    %v90 = vld [vmem:[#allocation6 + $0x8] sm:$0xff]
    %v91 = vld [vmem:[#allocation6 + $0x10] sm:$0xff]
    %v92 = vld [vmem:[#allocation6 + $0x18] sm:$0xff]
    %v93 = vld [vmem:[#allocation6 + $0x20] sm:$0xff]
    %v94 = vld [vmem:[#allocation6 + $0x28] sm:$0xff]
    %v95 = vld [vmem:[#allocation6 + $0x30] sm:$0xff]
    %v96 = vld [vmem:[#allocation6 + $0x38] sm:$0xff]
    %v97 = vunpack.c.0.s8 %v89
    %v98 = vunpack.c.1.s8 %v89
    %v99 = vunpack.c.2.s8 %v89
    %v100 = vunpack.c.3.s8 %v89
    %v101 = vunpack.c.0.s8 %v90
    %v102 = vunpack.c.1.s8 %v90
    %v103 = vunpack.c.2.s8 %v90
    %v104 = vunpack.c.3.s8 %v90
    %v105 = vunpack.c.0.s8 %v91
    %v106 = vunpack.c.1.s8 %v91
    %v107 = vunpack.c.2.s8 %v91
    %v108 = vunpack.c.3.s8 %v91
    %v109 = vunpack.c.0.s8 %v92
    %v110 = vunpack.c.1.s8 %v92
    %v111 = vunpack.c.2.s8 %v92
    %v112 = vunpack.c.3.s8 %v92
    %v113 = vunpack.c.0.s8 %v93
    %v114 = vunpack.c.1.s8 %v93
    %v115 = vunpack.c.2.s8 %v93
    %v116 = vunpack.c.3.s8 %v93
    %v117 = vunpack.c.0.s8 %v94
    %v118 = vunpack.c.1.s8 %v94
    %v119 = vunpack.c.2.s8 %v94
    %v120 = vunpack.c.3.s8 %v94
    %v121 = vunpack.c.0.s8 %v95
    %v122 = vunpack.c.1.s8 %v95
    %v123 = vunpack.c.2.s8 %v95
    %v124 = vunpack.c.3.s8 %v95
    %v125 = vunpack.c.0.s8 %v96
    %v126 = vunpack.c.1.s8 %v96
    %v127 = vunpack.c.2.s8 %v96
    %v128 = vunpack.c.3.s8 %v96
    %v129 = vcvt.s32.f32 %v97
    %v130 = vcvt.s32.f32 %v98
    %v131 = vcvt.s32.f32 %v99
    %v132 = vcvt.s32.f32 %v100
    %v133 = vcvt.s32.f32 %v101
    %v134 = vcvt.s32.f32 %v102
    %v135 = vcvt.s32.f32 %v103
    %v136 = vcvt.s32.f32 %v104
    %v137 = vcvt.s32.f32 %v105
    %v138 = vcvt.s32.f32 %v106
    %v139 = vcvt.s32.f32 %v107
    %v140 = vcvt.s32.f32 %v108
    %v141 = vcvt.s32.f32 %v109
    %v142 = vcvt.s32.f32 %v110
    %v143 = vcvt.s32.f32 %v111
    %v144 = vcvt.s32.f32 %v112
    %v145 = vcvt.s32.f32 %v113
    %v146 = vcvt.s32.f32 %v114
    %v147 = vcvt.s32.f32 %v115
    %v148 = vcvt.s32.f32 %v116
    %v149 = vcvt.s32.f32 %v117
    %v150 = vcvt.s32.f32 %v118
    %v151 = vcvt.s32.f32 %v119
    %v152 = vcvt.s32.f32 %v120
    %v153 = vcvt.s32.f32 %v121
    %v154 = vcvt.s32.f32 %v122
    %v155 = vcvt.s32.f32 %v123
    %v156 = vcvt.s32.f32 %v124
    %v157 = vcvt.s32.f32 %v125
    %v158 = vcvt.s32.f32 %v126
    %v159 = vcvt.s32.f32 %v127
    %v160 = vcvt.s32.f32 %v128
    %v161 = vmul.f32 %v57, %v129
    %v162 = vmul.f32 %v58, %v130
    %v163 = vmul.f32 %v59, %v131
    %v164 = vmul.f32 %v60, %v132
    %v165 = vmul.f32 %v61, %v133
    %v166 = vmul.f32 %v62, %v134
    %v167 = vmul.f32 %v63, %v135
    %v168 = vmul.f32 %v64, %v136
    %v169 = vmul.f32 %v65, %v137
    %v170 = vmul.f32 %v66, %v138
    %v171 = vmul.f32 %v67, %v139
    %v172 = vmul.f32 %v68, %v140
    %v173 = vmul.f32 %v69, %v141
    %v174 = vmul.f32 %v70, %v142
    %v175 = vmul.f32 %v71, %v143
    %v176 = vmul.f32 %v72, %v144
    %v177 = vmul.f32 %v73, %v145
    %v178 = vmul.f32 %v74, %v146
    %v179 = vmul.f32 %v75, %v147
    %v180 = vmul.f32 %v76, %v148
    %v181 = vmul.f32 %v77, %v149
    %v182 = vmul.f32 %v78, %v150
    %v183 = vmul.f32 %v79, %v151
    %v184 = vmul.f32 %v80, %v152
    %v185 = vmul.f32 %v81, %v153
    %v186 = vmul.f32 %v82, %v154
    %v187 = vmul.f32 %v83, %v155
    %v188 = vmul.f32 %v84, %v156
    %v189 = vmul.f32 %v85, %v157
    %v190 = vmul.f32 %v86, %v158
    %v191 = vmul.f32 %v87, %v159
    %v192 = vmul.f32 %v88, %v160
    %v193 = vld [vmem:[#allocation2] sm:$0xff]
    %v194 = vadd.f32 %v161, %v162
    %v195 = vadd.f32 %v194, %v163
    %v196 = vadd.f32 %v195, %v164
    %v197 = vadd.f32 %v196, %v165
    %v198 = vadd.f32 %v197, %v166
    %v199 = vadd.f32 %v198, %v167
    %v200 = vadd.f32 %v199, %v168
    %v201 = vadd.f32 %v200, %v169
    %v202 = vadd.f32 %v201, %v170
    %v203 = vadd.f32 %v202, %v171
    %v204 = vadd.f32 %v203, %v172
    %v205 = vadd.f32 %v204, %v173
    %v206 = vadd.f32 %v205, %v174
    %v207 = vadd.f32 %v206, %v175
    %v208 = vadd.f32 %v207, %v176
    %v209 = vadd.f32 %v208, %v177
    %v210 = vadd.f32 %v209, %v178
    %v211 = vadd.f32 %v210, %v179
    %v212 = vadd.f32 %v211, %v180
    %v213 = vadd.f32 %v212, %v181
    %v214 = vadd.f32 %v213, %v182
    %v215 = vadd.f32 %v214, %v183
    %v216 = vadd.f32 %v215, %v184
    %v217 = vadd.f32 %v216, %v185
    %v218 = vadd.f32 %v217, %v186
    %v219 = vadd.f32 %v218, %v187
    %v220 = vadd.f32 %v219, %v188
    %v221 = vadd.f32 %v220, %v189
    %v222 = vadd.f32 %v221, %v190
    %v223 = vadd.f32 %v222, %v191
    %v224 = vadd.f32 %v223, %v192
    %v225 = vadd.f32 %v193, %v224
    %226 = vst [vmem:[#allocation2] sm:$0xff] %v225
    // Predicated region
    $region22: #{tpu_custom_call.1} parent=1 // pred_check
      %p227 = pneg %p52
    $region23: #{tpu_custom_call.1} parent=1 // pred_check_branch
      %229 = sbr.rel (%p227) target = $region25
    $region24: #{tpu_custom_call.1} parent=1 // pred_region
      %v230 = vld [vmem:[#allocation2] sm:$0xff]
      %231 = vst [vmem:[#allocation8] sm:$0xff] %v230
    $region25: #{tpu_custom_call.1} parent=1 // pred_fallthru
      _
    // Predicated region
    $region26: #{tpu_custom_call.1} parent=1 // pred_check
      _
    $region27: #{tpu_custom_call.1} parent=1 // pred_check_branch
      %233 = sbr.rel (0) target = $region29
    $region28: #{tpu_custom_call.1} parent=1 // pred_region
      %s235 = ssub.s32 128, 128
      %236 = vsyncadd [#allocation5], %s235
      %s238 = sshll.u32 [#allocation8], 4
      %s239 = int_to_ptr.vmem [resolvable:$true] %s238
      %241 = dma.vmem_to_hbm [thread:$0]  %s239, 128, %s2, [#allocation5]
    $region29: #{tpu_custom_call.1} parent=1 // pred_fallthru
      _
    // Predicated region
    $region30: #{tpu_custom_call.1} parent=1 // pred_check
      _
    $region31: #{tpu_custom_call.1} parent=1 // pred_check_branch
      %243 = sbr.rel (0) target = $region33
    $region32: #{tpu_custom_call.1} parent=1 // pred_region
      %244 = dma.done [#allocation5], 128
    $region33: #{tpu_custom_call.1} parent=1 // pred_fallthru
      _
    %245 = vsyncpa [#allocation4], 1
    %246 = vsyncpa [#allocation7], 1
    %247 = vsyncpa [#allocation5], 1

</llo_original>
